<compile_context>
chip_gen: v6e
topology: v6e:2x2x1
jax: 0.10.0
libtpu: 0.0.40
codegen_flags: <defaults>
</compile_context>

<pallas_src>
import functools
import sys

import jax
import jax.numpy as jnp
import numpy as np
from jax.experimental import pallas as pl
from jax.experimental.pallas import tpu as pltpu

noise_exempt_keys = ['trans_method', 'compression_ratio', 'original_size',
                     'padded_shape', 'block_size', 'sampling_ratio',
                     'n_channels', 'blocks_h', 'blocks_w']

LANES = 512          # lane-dense slab width (multiple of 128)
MAX_BLOCK_R = 256    # rows per grid block -> 256*512*4B = 512 KiB f32 blocks
SUBLANE_MULT = 32    # row rounding (covers f32/bf16/int8 sublane packing)


def _round_up(a, b):
    return -(-a // b) * b


# ---------------------------------------------------------------------------
# Kernel 1: signal power (sum of squares).  Per-step work is pure VPU
# (acc += x*x into a VMEM vector scratch); the cross-lane/sublane reduce and
# the (1,1) store happen only once, at the last grid step.
# ---------------------------------------------------------------------------
def _power_kernel(x_ref, ss_ref, acc_ref):
    i = pl.program_id(0)

    @pl.when(i == 0)
    def _init():
        acc_ref[...] = jnp.zeros_like(acc_ref)

    x = x_ref[...].astype(jnp.float32)
    acc_ref[...] += x * x

    @pl.when(i == pl.num_programs(0) - 1)
    def _finalize():
        col = jnp.sum(acc_ref[...], axis=0, keepdims=True)   # (1, LANES)
        ss_ref[...] = jnp.sum(col, axis=1, keepdims=True)     # (1, 1)


# ---------------------------------------------------------------------------
# Kernel 2: AWGN injection.  sigma is a precomputed SMEM scalar; noise is a
# precomputed standard-normal slab streamed in alongside x.
# ---------------------------------------------------------------------------
def _awgn_kernel(sigma_ref, x_ref, n_ref, o_ref):
    sigma = sigma_ref[0]
    x = x_ref[...].astype(jnp.float32)
    noise = n_ref[...].astype(jnp.float32)
    o_ref[...] = (x + sigma * noise).astype(o_ref.dtype)


def _power_pallas(slab, block_r):
    rows, lanes = slab.shape
    return pl.pallas_call(
        _power_kernel,
        out_shape=jax.ShapeDtypeStruct((1, 1), jnp.float32),
        grid=(rows // block_r,),
        in_specs=[pl.BlockSpec((block_r, lanes), lambda i: (i, 0))],
        out_specs=pl.BlockSpec((1, 1), lambda i: (0, 0)),
        scratch_shapes=[pltpu.VMEM((block_r, lanes), jnp.float32)],
        compiler_params=pltpu.CompilerParams(dimension_semantics=("arbitrary",)),
    )(slab)


def _awgn_pallas(slab, noise, sigma, block_r):
    rows, lanes = slab.shape
    return pl.pallas_call(
        _awgn_kernel,
        out_shape=jax.ShapeDtypeStruct(slab.shape, slab.dtype),
        grid=(rows // block_r,),
        in_specs=[
            pl.BlockSpec(memory_space=pltpu.MemorySpace.SMEM),   # sigma (1,)
            pl.BlockSpec((block_r, lanes), lambda i: (i, 0)),    # x block
            pl.BlockSpec((block_r, lanes), lambda i: (i, 0)),    # noise block
        ],
        out_specs=pl.BlockSpec((block_r, lanes), lambda i: (i, 0)),
        # "parallel" lets v7x shard the elementwise grid across both TCs;
        # free/neutral on v5e/v6e.
        compiler_params=pltpu.CompilerParams(dimension_semantics=("parallel",)),
    )(sigma, slab, noise)


# ---------------------------------------------------------------------------
# jit-cached pipeline: pack -> measure power -> sigma -> add noise -> unpack.
# Traced once per (shape, dtype); snr enters as a traced scalar (no retrace).
# ---------------------------------------------------------------------------
@jax.jit
def _awgn_pipeline(x, key, inv_snr_lin):
    compute_dtype = x.dtype if jnp.issubdtype(x.dtype, jnp.floating) else jnp.float32
    xc = x.astype(compute_dtype)
    n = xc.size

    rows = max(1, -(-n // LANES))
    block_r = min(MAX_BLOCK_R, _round_up(rows, SUBLANE_MULT))
    rows_pad = _round_up(rows, block_r)
    total = rows_pad * LANES

    flat = xc.reshape(-1)
    if total != n:                       # static decision: only pad ragged sizes
        flat = jnp.pad(flat, (0, total - n))
    slab = flat.reshape(rows_pad, LANES)

    # TODO(synk): pltpu.prng_seed / pltpu.stateful_normal would draw the noise
    # in-kernel (halving HBM traffic), but those primitives have no
    # CPU/interpret lowering, so the Gaussian draw is done with
    # jax.random.normal and streamed into the kernel.
    noise = jax.random.normal(key, slab.shape, dtype=compute_dtype)

    ss = _power_pallas(slab, block_r)            # pad zeros don't bias sum(x^2)
    sigma = jnp.sqrt(ss[0, 0] * inv_snr_lin / n).astype(jnp.float32).reshape(1)

    noisy = _awgn_pallas(slab, noise, sigma, block_r)
    if total != n:
        out = noisy.reshape(-1)[:n].reshape(x.shape)
    else:
        out = noisy.reshape(x.shape)
    # TODO(synk): cast back silently truncates for integer / low-precision inputs.
    return out.astype(x.dtype)


def awgn_channel(x, snr_db, key):
    """Pallas equivalent of qam16ModulationTensor: power-matched AWGN at snr_db."""
    # TODO(synk): the original does bit-level 16-QAM mod/demod of the tensor
    # bytes; here channel noise is applied directly to the values at the same
    # SNR (no clean Pallas equivalent for byte/bit (de)modulation).
    x = jnp.asarray(x)
    if x.size == 0:
        return x
    inv_snr_lin = jnp.float32(10.0 ** (-float(snr_db) / 10.0))
    return _awgn_pipeline(x, key, inv_snr_lin)


# ---------------------------------------------------------------------------
# Channel module (host-side glue mirroring the PyTorch forward semantics).
# ---------------------------------------------------------------------------
class Channel:
    def __init__(self, channel_type='awgn', snr=10.0, seed=0):
        assert channel_type in ['none', 'awgn'], 'Only AWGN channel is supported.'
        self.chan_type = channel_type
        self.snr = snr
        self._key = jax.random.PRNGKey(seed)

    def _next_key(self):
        # Independent key per tensor -> no correlated noise across payload fields.
        self._key, sub = jax.random.split(self._key)
        return sub

    # ---- size accounting (host-side, same spirit as calculate_size_KB) ----
    def calculate_size_KB(self, data, sparse=False):
        def get_byte_size(obj):
            if obj is None:
                return 0
            if isinstance(obj, (int, float)):
                return sys.getsizeof(obj)
            if isinstance(obj, str):
                return len(obj.encode('utf-8'))
            if isinstance(obj, bytes):
                return sys.getsizeof(obj)
            if isinstance(obj, (tuple, list)):
                return sum(get_byte_size(v) for v in obj)
            if isinstance(obj, np.ndarray):
                return obj.nbytes
            if isinstance(obj, jnp.ndarray):
                return obj.dtype.itemsize * obj.size
            if isinstance(obj, dict):
                return sum(get_byte_size(v) for v in obj.values())
            # TODO(synk): PIL Image PNG/WebP byte-size accounting not supported here.
            raise ValueError(f'Unsupported input type: {type(obj)}')
        return get_byte_size(data) / 1024.0

    # ---- noise application (qam) ----
    def gaussian_noise_layer(self, input):
        if isinstance(input, jnp.ndarray):
            return awgn_channel(input, snr_db=self.snr, key=self._next_key())
        if isinstance(input, np.ndarray):
            out = awgn_channel(jnp.asarray(input), snr_db=self.snr, key=self._next_key())
            return np.asarray(out)
        # TODO(synk): string / PIL.Image QAM16 modulation paths have no tensor
        # compute equivalent; passed through unchanged.
        return input

    def qam(self, obj):
        if obj is None:
            return None
        if self.snr is None or self.snr >= 100:
            return obj
        if isinstance(obj, dict):
            return {k: (self.qam(v) if k not in noise_exempt_keys else v)
                    for k, v in obj.items()}
        if isinstance(obj, list):
            return [self.qam(i) for i in obj]
        if isinstance(obj, tuple):
            return tuple(self.qam(i) for i in obj)
        if self.chan_type == 'none':
            return obj
        if self.chan_type == 'awgn':
            return self.gaussian_noise_layer(obj)
        raise ValueError(f'Unsupported channel type {self.chan_type}')

    def forward(self, input):
        if isinstance(input, list):
            return [self.forward(i) for i in input]
        if isinstance(input, tuple):
            return tuple(self.forward(i) for i in input)
        input_sizes = dict(total=self.calculate_size_KB(input))
        if 'clip_description' in input:
            input_sizes['text'] = self.calculate_size_KB(input['clip_description'])
        if 'contour' in input:
            input_sizes['edge'] = self.calculate_size_KB(input['contour'])
        if 'sampled_pixels' in input:
            input_sizes['sparse'] = self.calculate_size_KB(input['sampled_pixels'])
        return (self.qam(input), input_sizes)

    __call__ = forward


# ---------------------------------------------------------------------------
if __name__ == "__main__":
    key = jax.random.PRNGKey(0)
    k1, k2 = jax.random.split(key)

    # NCHW image-feature tensor + a sparse-pixel tensor + exempt metadata.
    x = jax.random.normal(k1, (2, 4, 16, 16), dtype=jnp.float32)
    sampled = jax.random.normal(k2, (2, 4, 16, 16), dtype=jnp.float32)

    payload = {
        'image_feature': x,
        'sampled_pixels': sampled,
        'clip_description': 'a small test image',
        'compression_ratio': 0.25,        # noise-exempt key: must pass through
    }

    channel = Channel(channel_type='awgn', snr=10.0)
    noisy, sizes = channel(payload)

    jax.block_until_ready(noisy['image_feature'])
    jax.block_until_ready(noisy['sampled_pixels'])

    # Sanity checks.
    assert noisy['image_feature'].shape == x.shape
    assert noisy['image_feature'].dtype == x.dtype
    assert noisy['compression_ratio'] == 0.25          # exempt key untouched

    noise_a = noisy['image_feature'] - x
    noise_b = noisy['sampled_pixels'] - sampled
    sig_p = float(jnp.mean(x * x))
    noise_p = float(jnp.mean(noise_a * noise_a))
    measured_snr_db = 10.0 * jnp.log10(sig_p / noise_p)
    assert abs(float(measured_snr_db) - 10.0) < 1.5, measured_snr_db
    assert float(jnp.max(jnp.abs(noise_a))) > 0.0
    # Per-tensor keys -> independent noise realizations across payload fields.
    assert not bool(jnp.allclose(noise_a, noise_b))
    assert sizes['total'] > 0.0 and sizes['text'] > 0.0 and sizes['sparse'] > 0.0

    print("KERNEL_OK")
</pallas_src>

<mosaic_0001>
module attributes {stable_mosaic.version = 11 : i64} {
  func.func @_power_kernel(%arg0: i32, %arg1: memref<32x512xf32, #tpu.memory_space<vmem>>, %arg2: memref<1x1xf32, #tpu.memory_space<vmem>>, %arg3: memref<32x512xf32, #tpu.memory_space<vmem>>) attributes {dimension_semantics = [#tpu.dimension_semantics<arbitrary>], iteration_bounds = array<i64: 1>, scalar_prefetch = 0 : i64, scratch_operands = 1 : i64, tpu.core_type = #tpu.core_type<tc>, window_params = [{transform_indices = @transform_0, window_bounds = array<i64: 32, 512>}, {pipeline_mode = #tpu.pipeline_mode<synchronous>, transform_indices = @transform_1, window_bounds = array<i64: 1, 1>}]} {
    %c0_i32 = arith.constant 0 : i32
    %0 = arith.cmpi eq, %arg0, %c0_i32 : i32
    %1 = arith.extui %0 : i1 to i32
    %c0_i32_0 = arith.constant 0 : i32
    %2 = arith.cmpi ne, %1, %c0_i32_0 : i32
    scf.if %2 {
      %cst = arith.constant 0.000000e+00 : f32
      %11 = vector.broadcast %cst : f32 to vector<32x512xf32>
      %c0_8 = arith.constant 0 : index
      %c0_9 = arith.constant 0 : index
      %12 = vector.load %arg3[%c0_8, %c0_9] : memref<32x512xf32, #tpu.memory_space<vmem>>, vector<32x512xf32>
      tpu.vector_store %arg3[%c0_8, %c0_9], %11 {strides = array<i32>} : memref<32x512xf32, #tpu.memory_space<vmem>>, vector<32x512xf32>,
    } else {
    }
    %c0 = arith.constant 0 : index
    %c0_1 = arith.constant 0 : index
    %3 = vector.load %arg1[%c0, %c0_1] : memref<32x512xf32, #tpu.memory_space<vmem>>, vector<32x512xf32>
    %c0_2 = arith.constant 0 : index
    %c0_3 = arith.constant 0 : index
    %4 = vector.load %arg3[%c0_2, %c0_3] : memref<32x512xf32, #tpu.memory_space<vmem>>, vector<32x512xf32>
    %5 = arith.mulf %3, %3 : vector<32x512xf32>
    %6 = arith.addf %4, %5 : vector<32x512xf32>
    %c0_4 = arith.constant 0 : index
    %c0_5 = arith.constant 0 : index
    %7 = vector.load %arg3[%c0_4, %c0_5] : memref<32x512xf32, #tpu.memory_space<vmem>>, vector<32x512xf32>
    tpu.vector_store %arg3[%c0_4, %c0_5], %6 {strides = array<i32>} : memref<32x512xf32, #tpu.memory_space<vmem>>, vector<32x512xf32>,
    %c0_i32_6 = arith.constant 0 : i32
    %8 = arith.cmpi eq, %arg0, %c0_i32_6 : i32
    %9 = arith.extui %8 : i1 to i32
    %c0_i32_7 = arith.constant 0 : i32
    %10 = arith.cmpi ne, %9, %c0_i32_7 : i32
    scf.if %10 {
      %c0_8 = arith.constant 0 : index
      %c0_9 = arith.constant 0 : index
      %11 = vector.load %arg3[%c0_8, %c0_9] : memref<32x512xf32, #tpu.memory_space<vmem>>, vector<32x512xf32>
      %cst = arith.constant dense<0.000000e+00> : vector<512xf32>
      %12 = vector.multi_reduction <add>, %11, %cst [0] : vector<32x512xf32> to vector<512xf32>
      %13 = vector.shape_cast %12 : vector<512xf32> to vector<1x512xf32>
      %cst_10 = arith.constant dense<0.000000e+00> : vector<1xf32>
      %14 = vector.multi_reduction <add>, %13, %cst_10 [1] : vector<1x512xf32> to vector<1xf32>
      %15 = vector.shape_cast %14 : vector<1xf32> to vector<1x1xf32>
      %c0_11 = arith.constant 0 : index
      %c0_12 = arith.constant 0 : index
      %16 = vector.load %arg2[%c0_11, %c0_12] : memref<1x1xf32, #tpu.memory_space<vmem>>, vector<1x1xf32>
      tpu.vector_store %arg2[%c0_11, %c0_12], %15 {strides = array<i32>} : memref<1x1xf32, #tpu.memory_space<vmem>>, vector<1x1xf32>,
    } else {
    }
    return
  }
  func.func @transform_0(%arg0: i32) -> (i32, i32) {
    %c0_i32 = arith.constant 0 : i32
    %c0_i32_0 = arith.constant 0 : i32
    return %arg0, %c0_i32 : i32, i32
  }
  func.func @transform_1(%arg0: i32) -> (i32, i32) {
    %c0_i32 = arith.constant 0 : i32
    %c0_i32_0 = arith.constant 0 : i32
    %c0_i32_1 = arith.constant 0 : i32
    return %c0_i32, %c0_i32_0 : i32, i32
  }
}

module attributes {stable_mosaic.version = 11 : i64} {
  func.func @_awgn_kernel(%arg0: i32, %arg1: memref<1xf32, #tpu.memory_space<smem>>, %arg2: memref<32x512xf32, #tpu.memory_space<vmem>>, %arg3: memref<32x512xf32, #tpu.memory_space<vmem>>, %arg4: memref<32x512xf32, #tpu.memory_space<vmem>>) attributes {dimension_semantics = [#tpu.dimension_semantics<parallel>], iteration_bounds = array<i64: 1>, scalar_prefetch = 0 : i64, scratch_operands = 0 : i64, tpu.core_type = #tpu.core_type<tc>, window_params = [{transform_indices = @transform_0, window_bounds = array<i64: 1>}, {transform_indices = @transform_1, window_bounds = array<i64: 32, 512>}, {transform_indices = @transform_2, window_bounds = array<i64: 32, 512>}, {transform_indices = @transform_3, window_bounds = array<i64: 32, 512>}]} {
    %c0 = arith.constant 0 : index
    %0 = memref.load %arg1[%c0] : memref<1xf32, #tpu.memory_space<smem>>
    %c0_0 = arith.constant 0 : index
    %c0_1 = arith.constant 0 : index
    %1 = vector.load %arg2[%c0_0, %c0_1] : memref<32x512xf32, #tpu.memory_space<vmem>>, vector<32x512xf32>
    %c0_2 = arith.constant 0 : index
    %c0_3 = arith.constant 0 : index
    %2 = vector.load %arg3[%c0_2, %c0_3] : memref<32x512xf32, #tpu.memory_space<vmem>>, vector<32x512xf32>
    %3 = vector.broadcast %0 : f32 to vector<32x512xf32>
    %4 = arith.mulf %3, %2 : vector<32x512xf32>
    %5 = arith.addf %1, %4 : vector<32x512xf32>
    %c0_4 = arith.constant 0 : index
    %c0_5 = arith.constant 0 : index
    %6 = vector.load %arg4[%c0_4, %c0_5] : memref<32x512xf32, #tpu.memory_space<vmem>>, vector<32x512xf32>
    tpu.vector_store %arg4[%c0_4, %c0_5], %5 {strides = array<i32>} : memref<32x512xf32, #tpu.memory_space<vmem>>, vector<32x512xf32>,
    return
  }
  func.func @transform_0(%arg0: i32) -> i32 {
    %c0_i32 = arith.constant 0 : i32
    %c0_i32_0 = arith.constant 0 : i32
    return %c0_i32 : i32
  }
  func.func @transform_1(%arg0: i32) -> (i32, i32) {
    %c0_i32 = arith.constant 0 : i32
    %c0_i32_0 = arith.constant 0 : i32
    return %arg0, %c0_i32 : i32, i32
  }
  func.func @transform_2(%arg0: i32) -> (i32, i32) {
    %c0_i32 = arith.constant 0 : i32
    %c0_i32_0 = arith.constant 0 : i32
    return %arg0, %c0_i32 : i32, i32
  }
  func.func @transform_3(%arg0: i32) -> (i32, i32) {
    %c0_i32 = arith.constant 0 : i32
    %c0_i32_0 = arith.constant 0 : i32
    return %arg0, %c0_i32 : i32, i32
  }
}

</mosaic_0001>

<llo_original>
// kernel: _awgn_pipeline.3
$region0: #{_awgn_pipeline.3}
  #allocation0 [shape = 'u32[]', space=smem, size = 0x4, offset = 0x4, fixed_abs, tag = 'smem constant byte address 0x4 - core index']
  #allocation1 [shape = 'u32[144,128]{1,0:T(1,128)}', space=vmem, size = 0x12000, scoped, tag = 'internal scratch']
  #allocation2 [shape = 'f32[1]{0:T(128)S(6)}', space=smem, size = 0x200, scoped, tag = 'scoped memory for _awgn_pipeline.3']
  %s0 = inlined_call_operand.<no memory space> [shape: f32[1], index: 0, kind: input, shape index: {}]
  %s1 = inlined_call_operand.vmem [shape: f32[32,512], index: 1, kind: input, shape index: {}]
  %s2 = inlined_call_operand.vmem [shape: f32[32,512], index: 2, kind: input, shape index: {}]
  %s3 = inlined_call_operand.vmem [shape: f32[32,512], index: 3, kind: output, shape index: {}]
  %s4 = sld [smem:[#allocation0]]
  $region22: #{_awgn_pipeline.3} parent=0
    _
  %s6 = ssub.s32 1, %s4
  %s7 = scalar_select 0, %s6, %s4
  %8 = sst [smem:[#allocation2]] %s0
  // Predicated region
  $region2: #{_awgn_pipeline.3} parent=0 // pred_check
    _
  $region3: #{_awgn_pipeline.3} parent=0 // pred_check_branch
    %10 = sbr.rel (0) target = $region5
  $region4: #{_awgn_pipeline.3} parent=0 // pred_region
    _
  $region5: #{_awgn_pipeline.3} parent=0 // pred_fallthru
    _
  // Predicated region
  $region6: #{_awgn_pipeline.3} parent=0 // pred_check
    _
  $region7: #{_awgn_pipeline.3} parent=0 // pred_check_branch
    %12 = sbr.rel (0) target = $region9
  $region8: #{_awgn_pipeline.3} parent=0 // pred_region
    _
  $region9: #{_awgn_pipeline.3} parent=0 // pred_fallthru
    _
  // Predicated region
  $region10: #{_awgn_pipeline.3} parent=0 // pred_check
    _
  $region11: #{_awgn_pipeline.3} parent=0 // pred_check_branch
    %14 = sbr.rel (0) target = $region13
  $region12: #{_awgn_pipeline.3} parent=0 // pred_region
    _
  $region13: #{_awgn_pipeline.3} parent=0 // pred_fallthru
    _
  %s15 = sld [smem:[#allocation2]]
  %v16 = vld [vmem:[%s1] sm:$0xff]
  %v17 = vld [vmem:[%s1 + $0x8] sm:$0xff]
  %v18 = vld [vmem:[%s1 + $0x10] sm:$0xff]
  %v19 = vld [vmem:[%s1 + $0x18] sm:$0xff]
  %v20 = vld [vmem:[%s1 + $0x20] sm:$0xff]
  %v21 = vld [vmem:[%s1 + $0x28] sm:$0xff]
  %v22 = vld [vmem:[%s1 + $0x30] sm:$0xff]
  %v23 = vld [vmem:[%s1 + $0x38] sm:$0xff]
  %v24 = vld [vmem:[%s1 + $0x40] sm:$0xff]
  %v25 = vld [vmem:[%s1 + $0x48] sm:$0xff]
  %v26 = vld [vmem:[%s1 + $0x50] sm:$0xff]
  %v27 = vld [vmem:[%s1 + $0x58] sm:$0xff]
  %v28 = vld [vmem:[%s1 + $0x60] sm:$0xff]
  %v29 = vld [vmem:[%s1 + $0x68] sm:$0xff]
  %v30 = vld [vmem:[%s1 + $0x70] sm:$0xff]
  %v31 = vld [vmem:[%s1 + $0x78] sm:$0xff]
  %v32 = vld [vmem:[%s2] sm:$0xff]
  %v33 = vld [vmem:[%s2 + $0x8] sm:$0xff]
  %v34 = vld [vmem:[%s2 + $0x10] sm:$0xff]
  %v35 = vld [vmem:[%s2 + $0x18] sm:$0xff]
  %v36 = vld [vmem:[%s2 + $0x20] sm:$0xff]
  %v37 = vld [vmem:[%s2 + $0x28] sm:$0xff]
  %v38 = vld [vmem:[%s2 + $0x30] sm:$0xff]
  %v39 = vld [vmem:[%s2 + $0x38] sm:$0xff]
  %v40 = vld [vmem:[%s2 + $0x40] sm:$0xff]
  %v41 = vld [vmem:[%s2 + $0x48] sm:$0xff]
  %v42 = vld [vmem:[%s2 + $0x50] sm:$0xff]
  %v43 = vld [vmem:[%s2 + $0x58] sm:$0xff]
  %v44 = vld [vmem:[%s2 + $0x60] sm:$0xff]
  %v45 = vld [vmem:[%s2 + $0x68] sm:$0xff]
  %v46 = vld [vmem:[%s2 + $0x70] sm:$0xff]
  %v47 = vld [vmem:[%s2 + $0x78] sm:$0xff]
  %v48 = vstv %s15
  %v49 = vmul.f32 %v48, %v32
  %v50 = vmul.f32 %v48, %v33
  %v51 = vmul.f32 %v48, %v34
  %v52 = vmul.f32 %v48, %v35
  %v53 = vmul.f32 %v48, %v36
  %v54 = vmul.f32 %v48, %v37
  %v55 = vmul.f32 %v48, %v38
  %v56 = vmul.f32 %v48, %v39
  %v57 = vmul.f32 %v48, %v40
  %v58 = vmul.f32 %v48, %v41
  %v59 = vmul.f32 %v48, %v42
  %v60 = vmul.f32 %v48, %v43
  %v61 = vmul.f32 %v48, %v44
  %v62 = vmul.f32 %v48, %v45
  %v63 = vmul.f32 %v48, %v46
  %v64 = vmul.f32 %v48, %v47
  %v65 = vadd.f32 %v16, %v49
  %v66 = vadd.f32 %v17, %v50
  %v67 = vadd.f32 %v18, %v51
  %v68 = vadd.f32 %v19, %v52
  %v69 = vadd.f32 %v20, %v53
  %v70 = vadd.f32 %v21, %v54
  %v71 = vadd.f32 %v22, %v55
  %v72 = vadd.f32 %v23, %v56
  %v73 = vadd.f32 %v24, %v57
  %v74 = vadd.f32 %v25, %v58
  %v75 = vadd.f32 %v26, %v59
  %v76 = vadd.f32 %v27, %v60
  %v77 = vadd.f32 %v28, %v61
  %v78 = vadd.f32 %v29, %v62
  %v79 = vadd.f32 %v30, %v63
  %v80 = vadd.f32 %v31, %v64
  %81 = vst [vmem:[%s3] sm:$0xff] %v65
  %82 = vst [vmem:[%s3 + $0x8] sm:$0xff] %v66
  %83 = vst [vmem:[%s3 + $0x10] sm:$0xff] %v67
  %84 = vst [vmem:[%s3 + $0x18] sm:$0xff] %v68
  %85 = vst [vmem:[%s3 + $0x20] sm:$0xff] %v69
  %86 = vst [vmem:[%s3 + $0x28] sm:$0xff] %v70
  %87 = vst [vmem:[%s3 + $0x30] sm:$0xff] %v71
  %88 = vst [vmem:[%s3 + $0x38] sm:$0xff] %v72
  %89 = vst [vmem:[%s3 + $0x40] sm:$0xff] %v73
  %90 = vst [vmem:[%s3 + $0x48] sm:$0xff] %v74
  %91 = vst [vmem:[%s3 + $0x50] sm:$0xff] %v75
  %92 = vst [vmem:[%s3 + $0x58] sm:$0xff] %v76
  %93 = vst [vmem:[%s3 + $0x60] sm:$0xff] %v77
  %94 = vst [vmem:[%s3 + $0x68] sm:$0xff] %v78
  %95 = vst [vmem:[%s3 + $0x70] sm:$0xff] %v79
  %96 = vst [vmem:[%s3 + $0x78] sm:$0xff] %v80
  // Predicated region
  $region14: #{_awgn_pipeline.3} parent=0 // pred_check
    _
  $region15: #{_awgn_pipeline.3} parent=0 // pred_check_branch
    %98 = sbr.rel (0) target = $region17
  $region16: #{_awgn_pipeline.3} parent=0 // pred_region
    _
  $region17: #{_awgn_pipeline.3} parent=0 // pred_fallthru
    _
  // Predicated region
  $region18: #{_awgn_pipeline.3} parent=0 // pred_check
    _
  $region19: #{_awgn_pipeline.3} parent=0 // pred_check_branch
    %100 = sbr.rel (0) target = $region21
  $region20: #{_awgn_pipeline.3} parent=0 // pred_region
    _
  $region21: #{_awgn_pipeline.3} parent=0 // pred_fallthru
    _

// kernel: _awgn_pipeline.2
$region0: #{_awgn_pipeline.2}
  #allocation0 [shape = 'u32[]', space=smem, size = 0x4, offset = 0x4, fixed_abs, tag = 'smem constant byte address 0x4 - core index']
  #allocation1 [shape = 'u32[144,128]{1,0:T(1,128)}', space=vmem, size = 0x12000, scoped, tag = 'internal scratch']
  #allocation2 [shape = 'f32[32,512]{1,0:T(8,128)}', space=vmem, size = 0x10000, scoped, tag = 'scratch operand']
  %s0 = inlined_call_operand.vmem [shape: f32[32,512], index: 0, kind: input, shape index: {}]
  %s1 = inlined_call_operand.hbm [shape: f32[1,1], index: 1, kind: output, shape index: {}]
  %s2 = sld [smem:[#allocation0]]
  $region22: #{_awgn_pipeline.2} parent=0
    _
  %s4 = ssub.s32 1, %s2
  %s5 = scalar_select 0, %s4, %s2
  $region1: #{_awgn_pipeline.2} parent=0
    #allocation3 [shape = 'u8[512]{0}', space=vmem, size = 0x400, scoped, tag = 'output window, operand 0, single buffered']
    #allocation4 [shape = 's32[1]{0}', space=sflag, size = 0x4, scoped, tag = 'scoped memory for _awgn_pipeline.2']
    %6 = vsyncpa [#allocation4], 0
    // Predicated region
    $region2: #{_awgn_pipeline.2} parent=1 // pred_check
      _
    $region3: #{_awgn_pipeline.2} parent=1 // pred_check_branch
      %8 = sbr.rel (0) target = $region5
    $region4: #{_awgn_pipeline.2} parent=1 // pred_region
      _
    $region5: #{_awgn_pipeline.2} parent=1 // pred_fallthru
      _
    %p9 = scmp.eq.s32.totalorder 0, 0
    // Predicated region
    $region6: #{_awgn_pipeline.2} parent=1 // pred_check
      %p10 = pneg %p9
    $region7: #{_awgn_pipeline.2} parent=1 // pred_check_branch
      %12 = sbr.rel (%p10) target = $region9
    $region8: #{_awgn_pipeline.2} parent=1 // pred_region
      %13 = vst [vmem:[#allocation2] sm:$0xff] 0.0
      %14 = vst [vmem:[#allocation2 + $0x8] sm:$0xff] 0.0
      %15 = vst [vmem:[#allocation2 + $0x10] sm:$0xff] 0.0
      %16 = vst [vmem:[#allocation2 + $0x18] sm:$0xff] 0.0
      %17 = vst [vmem:[#allocation2 + $0x20] sm:$0xff] 0.0
      %18 = vst [vmem:[#allocation2 + $0x28] sm:$0xff] 0.0
      %19 = vst [vmem:[#allocation2 + $0x30] sm:$0xff] 0.0
      %20 = vst [vmem:[#allocation2 + $0x38] sm:$0xff] 0.0
      %21 = vst [vmem:[#allocation2 + $0x40] sm:$0xff] 0.0
      %22 = vst [vmem:[#allocation2 + $0x48] sm:$0xff] 0.0
      %23 = vst [vmem:[#allocation2 + $0x50] sm:$0xff] 0.0
      %24 = vst [vmem:[#allocation2 + $0x58] sm:$0xff] 0.0
      %25 = vst [vmem:[#allocation2 + $0x60] sm:$0xff] 0.0
      %26 = vst [vmem:[#allocation2 + $0x68] sm:$0xff] 0.0
      %27 = vst [vmem:[#allocation2 + $0x70] sm:$0xff] 0.0
      %28 = vst [vmem:[#allocation2 + $0x78] sm:$0xff] 0.0
    $region9: #{_awgn_pipeline.2} parent=1 // pred_fallthru
      _
    %v29 = vld [vmem:[%s0] sm:$0xff]
    %v30 = vld [vmem:[%s0 + $0x8] sm:$0xff]
    %v31 = vld [vmem:[%s0 + $0x10] sm:$0xff]
    %v32 = vld [vmem:[%s0 + $0x18] sm:$0xff]
    %v33 = vld [vmem:[%s0 + $0x20] sm:$0xff]
    %v34 = vld [vmem:[%s0 + $0x28] sm:$0xff]
    %v35 = vld [vmem:[%s0 + $0x30] sm:$0xff]
    %v36 = vld [vmem:[%s0 + $0x38] sm:$0xff]
    %v37 = vld [vmem:[%s0 + $0x40] sm:$0xff]
    %v38 = vld [vmem:[%s0 + $0x48] sm:$0xff]
    %v39 = vld [vmem:[%s0 + $0x50] sm:$0xff]
    %v40 = vld [vmem:[%s0 + $0x58] sm:$0xff]
    %v41 = vld [vmem:[%s0 + $0x60] sm:$0xff]
    %v42 = vld [vmem:[%s0 + $0x68] sm:$0xff]
    %v43 = vld [vmem:[%s0 + $0x70] sm:$0xff]
    %v44 = vld [vmem:[%s0 + $0x78] sm:$0xff]
    %v45 = vld [vmem:[#allocation2] sm:$0xff]
    %v46 = vld [vmem:[#allocation2 + $0x8] sm:$0xff]
    %v47 = vld [vmem:[#allocation2 + $0x10] sm:$0xff]
    %v48 = vld [vmem:[#allocation2 + $0x18] sm:$0xff]
    %v49 = vld [vmem:[#allocation2 + $0x20] sm:$0xff]
    %v50 = vld [vmem:[#allocation2 + $0x28] sm:$0xff]
    %v51 = vld [vmem:[#allocation2 + $0x30] sm:$0xff]
    %v52 = vld [vmem:[#allocation2 + $0x38] sm:$0xff]
    %v53 = vld [vmem:[#allocation2 + $0x40] sm:$0xff]
    %v54 = vld [vmem:[#allocation2 + $0x48] sm:$0xff]
    %v55 = vld [vmem:[#allocation2 + $0x50] sm:$0xff]
    %v56 = vld [vmem:[#allocation2 + $0x58] sm:$0xff]
    %v57 = vld [vmem:[#allocation2 + $0x60] sm:$0xff]
    %v58 = vld [vmem:[#allocation2 + $0x68] sm:$0xff]
    %v59 = vld [vmem:[#allocation2 + $0x70] sm:$0xff]
    %v60 = vld [vmem:[#allocation2 + $0x78] sm:$0xff]
    %v61 = vmul.f32 %v29, %v29
    %v62 = vmul.f32 %v30, %v30
    %v63 = vmul.f32 %v31, %v31
    %v64 = vmul.f32 %v32, %v32
    %v65 = vmul.f32 %v33, %v33
    %v66 = vmul.f32 %v34, %v34
    %v67 = vmul.f32 %v35, %v35
    %v68 = vmul.f32 %v36, %v36
    %v69 = vmul.f32 %v37, %v37
    %v70 = vmul.f32 %v38, %v38
    %v71 = vmul.f32 %v39, %v39
    %v72 = vmul.f32 %v40, %v40
    %v73 = vmul.f32 %v41, %v41
    %v74 = vmul.f32 %v42, %v42
    %v75 = vmul.f32 %v43, %v43
    %v76 = vmul.f32 %v44, %v44
    %v77 = vadd.f32 %v45, %v61
    %v78 = vadd.f32 %v46, %v62
    %v79 = vadd.f32 %v47, %v63
    %v80 = vadd.f32 %v48, %v64
    %v81 = vadd.f32 %v49, %v65
    %v82 = vadd.f32 %v50, %v66
    %v83 = vadd.f32 %v51, %v67
    %v84 = vadd.f32 %v52, %v68
    %v85 = vadd.f32 %v53, %v69
    %v86 = vadd.f32 %v54, %v70
    %v87 = vadd.f32 %v55, %v71
    %v88 = vadd.f32 %v56, %v72
    %v89 = vadd.f32 %v57, %v73
    %v90 = vadd.f32 %v58, %v74
    %v91 = vadd.f32 %v59, %v75
    %v92 = vadd.f32 %v60, %v76
    %93 = vst [vmem:[#allocation2] sm:$0xff] %v77
    %94 = vst [vmem:[#allocation2 + $0x8] sm:$0xff] %v78
    %95 = vst [vmem:[#allocation2 + $0x10] sm:$0xff] %v79
    %96 = vst [vmem:[#allocation2 + $0x18] sm:$0xff] %v80
    %97 = vst [vmem:[#allocation2 + $0x20] sm:$0xff] %v81
    %98 = vst [vmem:[#allocation2 + $0x28] sm:$0xff] %v82
    %99 = vst [vmem:[#allocation2 + $0x30] sm:$0xff] %v83
    %100 = vst [vmem:[#allocation2 + $0x38] sm:$0xff] %v84
    %101 = vst [vmem:[#allocation2 + $0x40] sm:$0xff] %v85
    %102 = vst [vmem:[#allocation2 + $0x48] sm:$0xff] %v86
    %103 = vst [vmem:[#allocation2 + $0x50] sm:$0xff] %v87
    %104 = vst [vmem:[#allocation2 + $0x58] sm:$0xff] %v88
    %105 = vst [vmem:[#allocation2 + $0x60] sm:$0xff] %v89
    %106 = vst [vmem:[#allocation2 + $0x68] sm:$0xff] %v90
    %107 = vst [vmem:[#allocation2 + $0x70] sm:$0xff] %v91
    %108 = vst [vmem:[#allocation2 + $0x78] sm:$0xff] %v92
    // Predicated region
    $region10: #{_awgn_pipeline.2} parent=1 // pred_check
      %p109 = pneg %p9
    $region11: #{_awgn_pipeline.2} parent=1 // pred_check_branch
      %111 = sbr.rel (%p109) target = $region13
    $region12: #{_awgn_pipeline.2} parent=1 // pred_region
      %v112 = vld [vmem:[#allocation2] sm:$0xff]
      %v113 = vld [vmem:[#allocation2 + $0x8] sm:$0xff]
      %v114 = vld [vmem:[#allocation2 + $0x10] sm:$0xff]
      %v115 = vld [vmem:[#allocation2 + $0x18] sm:$0xff]
      %v116 = vld [vmem:[#allocation2 + $0x20] sm:$0xff]
      %v117 = vld [vmem:[#allocation2 + $0x28] sm:$0xff]
      %v118 = vld [vmem:[#allocation2 + $0x30] sm:$0xff]
      %v119 = vld [vmem:[#allocation2 + $0x38] sm:$0xff]
      %v120 = vld [vmem:[#allocation2 + $0x40] sm:$0xff]
      %v121 = vld [vmem:[#allocation2 + $0x48] sm:$0xff]
      %v122 = vld [vmem:[#allocation2 + $0x50] sm:$0xff]
      %v123 = vld [vmem:[#allocation2 + $0x58] sm:$0xff]
      %v124 = vld [vmem:[#allocation2 + $0x60] sm:$0xff]
      %v125 = vld [vmem:[#allocation2 + $0x68] sm:$0xff]
      %v126 = vld [vmem:[#allocation2 + $0x70] sm:$0xff]
      %v127 = vld [vmem:[#allocation2 + $0x78] sm:$0xff]
      %v128 = vadd.f32 %v112, %v116
      %v129 = vadd.f32 %v128, %v120
      %v130 = vadd.f32 %v129, %v124
      %v131 = vrot.slane %v130, 4
      %v132 = vadd.f32 %v130, %v131
      %v133 = vrot.slane %v132, 2
      %v134 = vadd.f32 %v132, %v133
      %v135 = vrot.slane %v134, 1
      %v136 = vadd.f32 %v134, %v135
      %v137 = vadd.f32 %v113, %v117
      %v138 = vadd.f32 %v137, %v121
      %v139 = vadd.f32 %v138, %v125
      %v140 = vrot.slane %v139, 4
      %v141 = vadd.f32 %v139, %v140
      %v142 = vrot.slane %v141, 2
      %v143 = vadd.f32 %v141, %v142
      %v144 = vrot.slane %v143, 1
      %v145 = vadd.f32 %v143, %v144
      %v146 = vadd.f32 %v114, %v118
      %v147 = vadd.f32 %v146, %v122
      %v148 = vadd.f32 %v147, %v126
      %v149 = vrot.slane %v148, 4
      %v150 = vadd.f32 %v148, %v149
      %v151 = vrot.slane %v150, 2
      %v152 = vadd.f32 %v150, %v151
      %v153 = vrot.slane %v152, 1
      %v154 = vadd.f32 %v152, %v153
      %v155 = vadd.f32 %v115, %v119
      %v156 = vadd.f32 %v155, %v123
      %v157 = vadd.f32 %v156, %v127
      %v158 = vrot.slane %v157, 4
      %v159 = vadd.f32 %v157, %v158
      %v160 = vrot.slane %v159, 2
      %v161 = vadd.f32 %v159, %v160
      %v162 = vrot.slane %v161, 1
      %v163 = vadd.f32 %v161, %v162
      %v164 = vadd.f32 %v136, %v145
      %v165 = vadd.f32 %v164, %v154
      %v166 = vadd.f32 %v165, %v163
      %167 = vadd.xlane.f32.xlu0 %v166
      %v168 = vpop.xlane.xlu0 %167
      %vm169 = vcmask 0
      %170 = vst.msk [vmem:[#allocation3] sm:$0x1] %vm169, %v168
    $region13: #{_awgn_pipeline.2} parent=1 // pred_fallthru
      _
    // Predicated region
    $region14: #{_awgn_pipeline.2} parent=1 // pred_check
      _
    $region15: #{_awgn_pipeline.2} parent=1 // pred_check_branch
      %172 = sbr.rel (0) target = $region17
    $region16: #{_awgn_pipeline.2} parent=1 // pred_region
      %s174 = ssub.s32 16, 16
      %175 = vsyncadd [#allocation4], %s174
      %s177 = sshll.u32 [#allocation3], 4
      %s178 = int_to_ptr.vmem [resolvable:$true] %s177
      %180 = dma.vmem_to_hbm [thread:$0]  %s178, 16, %s1, [#allocation4]
    $region17: #{_awgn_pipeline.2} parent=1 // pred_fallthru
      _
    // Predicated region
    $region18: #{_awgn_pipeline.2} parent=1 // pred_check
      _
    $region19: #{_awgn_pipeline.2} parent=1 // pred_check_branch
      %182 = sbr.rel (0) target = $region21
    $region20: #{_awgn_pipeline.2} parent=1 // pred_region
      %183 = dma.done [#allocation4], 16
    $region21: #{_awgn_pipeline.2} parent=1 // pred_fallthru
      _
    %184 = vsyncpa [#allocation4], 1

</llo_original>
